<compile_context>
chip_gen: v6e
topology: v6e:2x2x1
jax: 0.10.0
libtpu: 0.0.40
codegen_flags: <defaults>
</compile_context>

<pallas_src>
from typing import NamedTuple, Tuple

import jax
import jax.numpy as jnp
from jax.experimental import pallas as pl
from jax.experimental.pallas import tpu as pltpu


def _round_up(n, m):
    return ((n + m - 1) // m) * m


def _device_kind() -> str:
    try:
        return jax.devices()[0].device_kind.lower()
    except Exception:
        return ""


def _is_v5e() -> bool:
    k = _device_kind()
    return ("v5e" in k) or ("v5 lite" in k) or ("v5lite" in k)


class PreparedParams(NamedTuple):
    arrays: Tuple[jax.Array, ...]   # (w0, b0, w1, b1, ...) already padded/cast
    dims: Tuple[int, ...]           # true layer dims [d0, d1, ..., dn]
    dims_eff: Tuple[int, ...]       # effective (kernel-visible) layer dims
    param_dtype: jnp.dtype


def prepare_params(weights, biases, *, param_dtype=None, pad_out_lanes=True):
    """Pad/cast the Linear parameters ONCE; reuse across forward calls.

    weights[i]: (d_in, d_out) float32 (i.e. torch weight.T); biases[i]: (d_out,).
    Only the output (N) dim of each layer is zero-padded to a multiple of 128
    lanes; the first K dim (input features) keeps its true width.  Zero padding
    is numerically exact (padded rows/cols/biases are zero, tanh(0) = 0).
    """
    if param_dtype is None:
        # v5e MXU is bf16/int-native; f32 matmuls go multi-pass there.
        param_dtype = jnp.bfloat16 if _is_v5e() else jnp.float32

    n_layers = len(weights)
    dims = tuple([weights[0].shape[0]] + [w.shape[1] for w in weights])

    dims_eff = [dims[0]]                                  # first K: true width
    for i in range(1, n_layers):
        dims_eff.append(_round_up(dims[i], 128))          # hidden: lane-dense
    dims_eff.append(_round_up(dims[-1], 128) if pad_out_lanes else dims[-1])
    dims_eff = tuple(dims_eff)
    # NOTE: if hidden/output dims ever exceed 128, consider rounding to 256 on
    # v6e/v7x (256-lane MXU output width); at these dims 128 is optimal.

    arrays = []
    for i, (w, b) in enumerate(zip(weights, biases)):
        d_in, d_out = dims[i], dims[i + 1]
        e_in, e_out = dims_eff[i], dims_eff[i + 1]
        w_p = jnp.zeros((e_in, e_out), jnp.float32).at[:d_in, :d_out].set(w)
        b_p = jnp.zeros((1, e_out), jnp.float32).at[0, :d_out].set(b)
        arrays.append(w_p.astype(param_dtype))            # weights in param_dtype
        arrays.append(b_p)                                # bias stays f32
    return PreparedParams(arrays=tuple(arrays), dims=dims, dims_eff=dims_eff,
                          param_dtype=jnp.dtype(param_dtype))


def _make_mlp_kernel(n_layers: int, compute_dtype, act_dtype):
    """Fused kernel body: x_tile, (w0, b0, w1, b1, ...), out_tile."""

    def kernel(x_ref, *refs):
        out_ref = refs[-1]
        h = x_ref[...]                                    # (TM, d0)
        for i in range(n_layers):
            w = refs[2 * i][...]                          # (e_in, e_out) compute_dtype
            b = refs[2 * i + 1][...]                      # (1, e_out)    f32
            acc = jnp.dot(h.astype(compute_dtype), w,
                          preferred_element_type=jnp.float32) + b
            if i != n_layers - 1:
                # bf16 tanh (native EUP on v6e/v7x) or f32 tanh (v5e / f32 mode).
                h = jnp.tanh(acc.astype(act_dtype))
            else:
                h = acc
        out_ref[...] = h.astype(out_ref.dtype)

    return kernel


def _default_tm(B: int) -> int:
    B8 = _round_up(max(B, 1), 8)
    if B8 <= 16:
        return B8
    # Even number of grid steps >= 2 (engages both v7x TensorCores), capped at
    # ~1024 rows per step (amortizes per-step overhead on single-TC v5e/v6e).
    steps = max(2, -(-B8 // 1024))
    if steps % 2:
        steps += 1
    return _round_up(-(-B8 // steps), 8)


def encoder_decoder_forward(x, params: PreparedParams, *, tm=None, act_dtype=None):
    """Fused MLP forward (Linear -> Tanh -> ... -> Linear) on pre-padded params."""
    n_layers = len(params.arrays) // 2
    dims, dims_eff = params.dims, params.dims_eff
    B, d_in0 = x.shape
    assert d_in0 == dims[0], (d_in0, dims[0])

    compute_dtype = params.param_dtype
    if act_dtype is None:
        use_bf16_act = (compute_dtype == jnp.dtype(jnp.bfloat16)) and not _is_v5e()
        act_dtype = jnp.bfloat16 if use_bf16_act else jnp.float32

    if tm is None:
        tm = _default_tm(B)
    tm = max(8, _round_up(tm, 8))
    B_pad = _round_up(B, tm)

    # Row-pad x only if the batch doesn't divide the tile (no lane padding).
    x_in = x if B_pad == B else jnp.pad(x, ((0, B_pad - B), (0, 0)))
    grid = (B_pad // tm,)

    d0_eff, out_eff = dims_eff[0], dims_eff[-1]

    # x / out stream over the batch grid; weights & biases use constant block
    # indices so they are fetched once and stay VMEM-resident across the grid.
    in_specs = [pl.BlockSpec((tm, d0_eff), lambda g: (g, 0))]
    for i in range(n_layers):
        in_specs.append(pl.BlockSpec((dims_eff[i], dims_eff[i + 1]),
                                     lambda g: (0, 0)))
        in_specs.append(pl.BlockSpec((1, dims_eff[i + 1]), lambda g: (0, 0)))
    out_spec = pl.BlockSpec((tm, out_eff), lambda g: (g, 0))

    # Advisory cost from the TRUE dims (padded dims would overstate work ~8x).
    itemsize = jnp.dtype(compute_dtype).itemsize
    flops = 2 * B * sum(dims[i] * dims[i + 1] for i in range(n_layers))
    transcendentals = B * sum(dims[1:-1])
    bytes_accessed = (B * dims[0] * 4 + B * dims[-1] * 4
                      + sum(dims[i] * dims[i + 1] * itemsize + dims[i + 1] * 4
                            for i in range(n_layers)))
    cost = pl.CostEstimate(flops=flops, transcendentals=transcendentals,
                           bytes_accessed=bytes_accessed)

    # Explicit VMEM budget: double-buffered in/out tiles, params (x2 buffers),
    # live intermediates, ~25% headroom; clamped to [8 MiB, 64 MiB].
    param_bytes = sum(int(a.size) * a.dtype.itemsize for a in params.arrays)
    tile_bytes = tm * d0_eff * 4 + tm * out_eff * 4
    interm_bytes = 4 * tm * max(dims_eff) * 4
    vmem_bytes = int(1.25 * (2 * tile_bytes + 2 * param_bytes + interm_bytes))
    vmem_bytes = min(max(vmem_bytes, 8 * 1024 * 1024), 64 * 1024 * 1024)

    kernel = _make_mlp_kernel(n_layers, compute_dtype, act_dtype)

    out_p = pl.pallas_call(
        kernel,
        out_shape=jax.ShapeDtypeStruct((B_pad, out_eff), jnp.float32),
        grid_spec=pltpu.PrefetchScalarGridSpec(
            num_scalar_prefetch=0,
            grid=grid,
            in_specs=in_specs,
            out_specs=out_spec,
        ),
        compiler_params=pltpu.CompilerParams(
            dimension_semantics=("parallel",),   # batch tiles are independent
            vmem_limit_bytes=vmem_bytes,
        ),
        cost_estimate=cost,
    )(x_in, *params.arrays)

    if B_pad == B and out_eff == dims[-1]:
        return out_p
    return out_p[:B, :dims[-1]]


def init_params(key, p_dims):
    """Xavier-normal weights (returned transposed to (in, out)) + torch-default biases."""
    weights_t, biases = [], []
    for d_in, d_out in zip(p_dims[:-1], p_dims[1:]):
        key, wk, bk = jax.random.split(key, 3)
        std = (2.0 / (d_in + d_out)) ** 0.5               # xavier_normal gain=1
        w = std * jax.random.normal(wk, (d_out, d_in), dtype=jnp.float32)
        bound = 1.0 / (d_in ** 0.5)                       # torch Linear default bias init
        b = jax.random.uniform(bk, (d_out,), minval=-bound, maxval=bound,
                               dtype=jnp.float32)
        weights_t.append(w.T)                             # (d_in, d_out)
        biases.append(b)
    return weights_t, biases


def reference_forward(x, weights, biases):
    """Pure-JAX reference matching the PyTorch forward semantics."""
    h = x
    n = len(weights)
    for i, (w, b) in enumerate(zip(weights, biases)):
        h = h @ w + b
        if i != n - 1:
            h = jnp.tanh(h)
    return h


if __name__ == "__main__":
    p_dims = [32, 64, 48, 16]   # input 32 -> hidden 64 -> hidden 48 -> out 16

    key = jax.random.PRNGKey(0)
    k_param, k_x1, k_x2, k_x3 = jax.random.split(key, 4)
    weights, biases = init_params(k_param, p_dims)

    # Parameter padding / casting hoisted out of the per-call path (done once).
    prep_f32 = prepare_params(weights, biases, param_dtype=jnp.float32)
    prep_f32_slim = prepare_params(weights, biases, param_dtype=jnp.float32,
                                   pad_out_lanes=False)
    prep_bf16 = prepare_params(weights, biases, param_dtype=jnp.bfloat16)

    # Case 1: tiny batch (single grid step), default tm.
    x_small = jax.random.normal(k_x1, (8, p_dims[0]), dtype=jnp.float32)
    out_small = jax.block_until_ready(encoder_decoder_forward(x_small, prep_f32))
    ref_small = reference_forward(x_small, weights, biases)
    assert out_small.shape == (8, p_dims[-1]), out_small.shape
    assert jnp.allclose(out_small, ref_small, atol=1e-4, rtol=1e-4), \
        "f32 small-batch mismatch vs reference"

    # Case 2: batch-tiled grid (2 pipelined steps), f32 params, lane-dense out.
    x_big = jax.random.normal(k_x2, (256, p_dims[0]), dtype=jnp.float32)
    ref_big = reference_forward(x_big, weights, biases)
    out_big = jax.block_until_ready(
        encoder_decoder_forward(x_big, prep_f32, tm=128))
    assert out_big.shape == (256, p_dims[-1]), out_big.shape
    assert jnp.allclose(out_big, ref_big, atol=1e-4, rtol=1e-4), \
        "f32 tiled-batch mismatch vs reference"

    # Case 3: default tm policy with a ragged batch (row-padding path).
    x_rag = jax.random.normal(k_x3, (100, p_dims[0]), dtype=jnp.float32)
    out_rag = jax.block_until_ready(encoder_decoder_forward(x_rag, prep_f32))
    ref_rag = reference_forward(x_rag, weights, biases)
    assert out_rag.shape == (100, p_dims[-1]), out_rag.shape
    assert jnp.allclose(out_rag, ref_rag, atol=1e-4, rtol=1e-4), \
        "f32 ragged-batch mismatch vs reference"

    # Case 4: true-width output block (masked stores, no wrapper slice).
    out_slim = jax.block_until_ready(
        encoder_decoder_forward(x_big, prep_f32_slim, tm=128))
    assert out_slim.shape == (256, p_dims[-1]), out_slim.shape
    assert jnp.allclose(out_slim, ref_big, atol=1e-4, rtol=1e-4), \
        "f32 unpadded-output mismatch vs reference"

    # Case 5: bf16 weights + bf16 tanh (f32 accumulation), looser tolerance.
    out_bf16 = jax.block_until_ready(
        encoder_decoder_forward(x_big, prep_bf16, tm=128,
                                act_dtype=jnp.bfloat16))
    assert jnp.allclose(out_bf16, ref_big, atol=7.5e-2, rtol=7.5e-2), \
        "bf16 mismatch vs reference"

    print("KERNEL_OK")
</pallas_src>

<mosaic_0001>
module attributes {stable_mosaic.version = 11 : i64} {
  func.func @kernel(%arg0: i32, %arg1: memref<8x32xf32, #tpu.memory_space<vmem>>, %arg2: memref<32x128xf32, #tpu.memory_space<vmem>>, %arg3: memref<1x128xf32, #tpu.memory_space<vmem>>, %arg4: memref<128x128xf32, #tpu.memory_space<vmem>>, %arg5: memref<1x128xf32, #tpu.memory_space<vmem>>, %arg6: memref<128x128xf32, #tpu.memory_space<vmem>>, %arg7: memref<1x128xf32, #tpu.memory_space<vmem>>, %arg8: memref<8x128xf32, #tpu.memory_space<vmem>>) attributes {dimension_semantics = [#tpu.dimension_semantics<parallel>], iteration_bounds = array<i64: 1>, scalar_prefetch = 0 : i64, scratch_operands = 0 : i64, tpu.core_type = #tpu.core_type<tc>, window_params = [{transform_indices = @transform_0, window_bounds = array<i64: 8, 32>}, {pipeline_mode = #tpu.pipeline_mode<synchronous>, transform_indices = @transform_1, window_bounds = array<i64: 32, 128>}, {pipeline_mode = #tpu.pipeline_mode<synchronous>, transform_indices = @transform_2, window_bounds = array<i64: 1, 128>}, {pipeline_mode = #tpu.pipeline_mode<synchronous>, transform_indices = @transform_3, window_bounds = array<i64: 128, 128>}, {pipeline_mode = #tpu.pipeline_mode<synchronous>, transform_indices = @transform_4, window_bounds = array<i64: 1, 128>}, {pipeline_mode = #tpu.pipeline_mode<synchronous>, transform_indices = @transform_5, window_bounds = array<i64: 128, 128>}, {pipeline_mode = #tpu.pipeline_mode<synchronous>, transform_indices = @transform_6, window_bounds = array<i64: 1, 128>}, {transform_indices = @transform_7, window_bounds = array<i64: 8, 128>}]} {
    %c0 = arith.constant 0 : index
    %c0_0 = arith.constant 0 : index
    %0 = vector.load %arg1[%c0, %c0_0] : memref<8x32xf32, #tpu.memory_space<vmem>>, vector<8x32xf32>
    %c0_1 = arith.constant 0 : index
    %c0_2 = arith.constant 0 : index
    %1 = vector.load %arg2[%c0_1, %c0_2] : memref<32x128xf32, #tpu.memory_space<vmem>>, vector<32x128xf32>
    %c0_3 = arith.constant 0 : index
    %c0_4 = arith.constant 0 : index
    %2 = vector.load %arg3[%c0_3, %c0_4] : memref<1x128xf32, #tpu.memory_space<vmem>>, vector<1x128xf32>
    %cst = arith.constant dense<0.000000e+00> : vector<8x128xf32>
    %3 = tpu.matmul %0, %1, %cst {dimension_numbers = #tpu.dot_dimension_numbers<[1], [0], [0], [1], [0, 0, 1, 1], [], []>} : vector<8x32xf32>, vector<32x128xf32>, vector<8x128xf32> -> vector<8x128xf32>
    %4 = vector.broadcast %2 : vector<1x128xf32> to vector<8x128xf32>
    %5 = arith.addf %3, %4 : vector<8x128xf32>
    %6 = math.tanh %5 : vector<8x128xf32>
    %c0_5 = arith.constant 0 : index
    %c0_6 = arith.constant 0 : index
    %7 = vector.load %arg4[%c0_5, %c0_6] : memref<128x128xf32, #tpu.memory_space<vmem>>, vector<128x128xf32>
    %c0_7 = arith.constant 0 : index
    %c0_8 = arith.constant 0 : index
    %8 = vector.load %arg5[%c0_7, %c0_8] : memref<1x128xf32, #tpu.memory_space<vmem>>, vector<1x128xf32>
    %cst_9 = arith.constant dense<0.000000e+00> : vector<8x128xf32>
    %9 = tpu.matmul %6, %7, %cst_9 {dimension_numbers = #tpu.dot_dimension_numbers<[1], [0], [0], [1], [0, 0, 1, 1], [], []>} : vector<8x128xf32>, vector<128x128xf32>, vector<8x128xf32> -> vector<8x128xf32>
    %10 = vector.broadcast %8 : vector<1x128xf32> to vector<8x128xf32>
    %11 = arith.addf %9, %10 : vector<8x128xf32>
    %12 = math.tanh %11 : vector<8x128xf32>
    %c0_10 = arith.constant 0 : index
    %c0_11 = arith.constant 0 : index
    %13 = vector.load %arg6[%c0_10, %c0_11] : memref<128x128xf32, #tpu.memory_space<vmem>>, vector<128x128xf32>
    %c0_12 = arith.constant 0 : index
    %c0_13 = arith.constant 0 : index
    %14 = vector.load %arg7[%c0_12, %c0_13] : memref<1x128xf32, #tpu.memory_space<vmem>>, vector<1x128xf32>
    %cst_14 = arith.constant dense<0.000000e+00> : vector<8x128xf32>
    %15 = tpu.matmul %12, %13, %cst_14 {dimension_numbers = #tpu.dot_dimension_numbers<[1], [0], [0], [1], [0, 0, 1, 1], [], []>} : vector<8x128xf32>, vector<128x128xf32>, vector<8x128xf32> -> vector<8x128xf32>
    %16 = vector.broadcast %14 : vector<1x128xf32> to vector<8x128xf32>
    %17 = arith.addf %15, %16 : vector<8x128xf32>
    %c0_15 = arith.constant 0 : index
    %c0_16 = arith.constant 0 : index
    %18 = vector.load %arg8[%c0_15, %c0_16] : memref<8x128xf32, #tpu.memory_space<vmem>>, vector<8x128xf32>
    tpu.vector_store %arg8[%c0_15, %c0_16], %17 {strides = array<i32>} : memref<8x128xf32, #tpu.memory_space<vmem>>, vector<8x128xf32>,
    return
  }
  func.func @transform_0(%arg0: i32) -> (i32, i32) {
    %c0_i32 = arith.constant 0 : i32
    %c0_i32_0 = arith.constant 0 : i32
    return %arg0, %c0_i32 : i32, i32
  }
  func.func @transform_1(%arg0: i32) -> (i32, i32) {
    %c0_i32 = arith.constant 0 : i32
    %c0_i32_0 = arith.constant 0 : i32
    %c0_i32_1 = arith.constant 0 : i32
    return %c0_i32, %c0_i32_0 : i32, i32
  }
  func.func @transform_2(%arg0: i32) -> (i32, i32) {
    %c0_i32 = arith.constant 0 : i32
    %c0_i32_0 = arith.constant 0 : i32
    %c0_i32_1 = arith.constant 0 : i32
    return %c0_i32, %c0_i32_0 : i32, i32
  }
  func.func @transform_3(%arg0: i32) -> (i32, i32) {
    %c0_i32 = arith.constant 0 : i32
    %c0_i32_0 = arith.constant 0 : i32
    %c0_i32_1 = arith.constant 0 : i32
    return %c0_i32, %c0_i32_0 : i32, i32
  }
  func.func @transform_4(%arg0: i32) -> (i32, i32) {
    %c0_i32 = arith.constant 0 : i32
    %c0_i32_0 = arith.constant 0 : i32
    %c0_i32_1 = arith.constant 0 : i32
    return %c0_i32, %c0_i32_0 : i32, i32
  }
  func.func @transform_5(%arg0: i32) -> (i32, i32) {
    %c0_i32 = arith.constant 0 : i32
    %c0_i32_0 = arith.constant 0 : i32
    %c0_i32_1 = arith.constant 0 : i32
    return %c0_i32, %c0_i32_0 : i32, i32
  }
  func.func @transform_6(%arg0: i32) -> (i32, i32) {
    %c0_i32 = arith.constant 0 : i32
    %c0_i32_0 = arith.constant 0 : i32
    %c0_i32_1 = arith.constant 0 : i32
    return %c0_i32, %c0_i32_0 : i32, i32
  }
  func.func @transform_7(%arg0: i32) -> (i32, i32) {
    %c0_i32 = arith.constant 0 : i32
    %c0_i32_0 = arith.constant 0 : i32
    return %arg0, %c0_i32 : i32, i32
  }
}

</mosaic_0001>

<llo_original>
// kernel: tpu_custom_call.1
$region0: #{tpu_custom_call.1}
  #allocation0 [shape = 'u32[]', space=smem, size = 0x4, offset = 0x4, fixed_abs, tag = 'smem constant byte address 0x4 - core index']
  #allocation1 [shape = 'u32[144,128]{1,0:T(1,128)}', space=vmem, size = 0x12000, scoped, tag = 'internal scratch']
  %s0 = inlined_call_operand.hbm [shape: f32[8,32], index: 0, kind: input, shape index: {}]
  %s1 = inlined_call_operand.hbm [shape: f32[32,128], index: 1, kind: input, shape index: {}]
  %s2 = inlined_call_operand.vmem [shape: f32[1,128], index: 2, kind: input, shape index: {}]
  %s3 = inlined_call_operand.hbm [shape: f32[128,128], index: 3, kind: input, shape index: {}]
  %s4 = inlined_call_operand.vmem [shape: f32[1,128], index: 4, kind: input, shape index: {}]
  %s5 = inlined_call_operand.hbm [shape: f32[128,128], index: 5, kind: input, shape index: {}]
  %s6 = inlined_call_operand.vmem [shape: f32[1,128], index: 6, kind: input, shape index: {}]
  %s7 = inlined_call_operand.hbm [shape: f32[8,128], index: 7, kind: output, shape index: {}]
  %s8 = sld [smem:[#allocation0]]
  $region54: #{tpu_custom_call.1} parent=0
    _
  %s10 = ssub.s32 1, %s8
  %s11 = scalar_select 0, %s10, %s8
  $region1: #{tpu_custom_call.1} parent=0
    #allocation2 [shape = 'u8[4096]{0}', space=vmem, size = 0x1000, scoped, tag = 'input window, operand 0, single buffered']
    #allocation3 [shape = 's32[1]{0}', space=sflag, size = 0x4, scoped, tag = 'scoped memory for tpu_custom_call.1']
    #allocation4 [shape = 's32[1]{0}', space=sflag, size = 0x4, scoped, tag = 'scoped memory for tpu_custom_call.1']
    #allocation5 [shape = 'u8[16384]{0}', space=vmem, size = 0x4000, scoped, tag = 'input window, operand 1, single buffered']
    #allocation6 [shape = 's32[1]{0}', space=sflag, size = 0x4, scoped, tag = 'scoped memory for tpu_custom_call.1']
    #allocation7 [shape = 'u8[65536]{0}', space=vmem, size = 0x10000, scoped, tag = 'input window, operand 3, single buffered']
    #allocation8 [shape = 'u8[65536]{0}', space=vmem, size = 0x10000, scoped, tag = 'input window, operand 5, single buffered']
    #allocation9 [shape = 's32[1]{0}', space=sflag, size = 0x4, scoped, tag = 'scoped memory for tpu_custom_call.1']
    #allocation10 [shape = 'u8[4096]{0}', space=vmem, size = 0x1000, scoped, tag = 'output window, operand 0, single buffered']
    %12 = vsyncpa [#allocation3], 0
    %13 = vsyncpa [#allocation6], 0
    %14 = vsyncpa [#allocation9], 0
    %15 = vsyncpa [#allocation4], 0
    // Predicated region
    $region2: #{tpu_custom_call.1} parent=1 // pred_check
      _
    $region3: #{tpu_custom_call.1} parent=1 // pred_check_branch
      %17 = sbr.rel (0) target = $region5
    $region4: #{tpu_custom_call.1} parent=1 // pred_region
      %s19 = ssub.s32 128, 128
      %20 = vsyncadd [#allocation3], %s19
      %s22 = sshll.u32 [#allocation2], 4
      %s23 = int_to_ptr.vmem [resolvable:$true] %s22
      %25 = dma.hbm_to_vmem [thread:$0]  %s0, 128, %s23, [#allocation3]
    $region5: #{tpu_custom_call.1} parent=1 // pred_fallthru
      _
    // Predicated region
    $region6: #{tpu_custom_call.1} parent=1 // pred_check
      _
    $region7: #{tpu_custom_call.1} parent=1 // pred_check_branch
      %27 = sbr.rel (0) target = $region9
    $region8: #{tpu_custom_call.1} parent=1 // pred_region
      %s29 = ssub.s32 512, 512
      %30 = vsyncadd [#allocation6], %s29
      %s31 = sshll.u32 [#allocation5], 4
      %s32 = int_to_ptr.vmem [resolvable:$true] %s31
      %37 = dma.hbm_to_vmem [thread:$0]  %s1, 512, %s32, [#allocation6], 128, 128, 8
    $region9: #{tpu_custom_call.1} parent=1 // pred_fallthru
      _
    // Predicated region
    $region10: #{tpu_custom_call.1} parent=1 // pred_check
      _
    $region11: #{tpu_custom_call.1} parent=1 // pred_check_branch
      %39 = sbr.rel (0) target = $region13
    $region12: #{tpu_custom_call.1} parent=1 // pred_region
      _
    $region13: #{tpu_custom_call.1} parent=1 // pred_fallthru
      _
    // Predicated region
    $region14: #{tpu_custom_call.1} parent=1 // pred_check
      _
    $region15: #{tpu_custom_call.1} parent=1 // pred_check_branch
      %41 = sbr.rel (0) target = $region17
    $region16: #{tpu_custom_call.1} parent=1 // pred_region
      %s43 = ssub.s32 2048, 2048
      %44 = vsyncadd [#allocation6], %s43
      %s45 = sshll.u32 [#allocation7], 4
      %s46 = int_to_ptr.vmem [resolvable:$true] %s45
      %51 = dma.hbm_to_vmem [thread:$0]  %s3, 2048, %s46, [#allocation6], 128, 128, 8
    $region17: #{tpu_custom_call.1} parent=1 // pred_fallthru
      _
    // Predicated region
    $region18: #{tpu_custom_call.1} parent=1 // pred_check
      _
    $region19: #{tpu_custom_call.1} parent=1 // pred_check_branch
      %53 = sbr.rel (0) target = $region21
    $region20: #{tpu_custom_call.1} parent=1 // pred_region
      _
    $region21: #{tpu_custom_call.1} parent=1 // pred_fallthru
      _
    // Predicated region
    $region22: #{tpu_custom_call.1} parent=1 // pred_check
      _
    $region23: #{tpu_custom_call.1} parent=1 // pred_check_branch
      %55 = sbr.rel (0) target = $region25
    $region24: #{tpu_custom_call.1} parent=1 // pred_region
      %s57 = ssub.s32 2048, 2048
      %58 = vsyncadd [#allocation9], %s57
      %s59 = sshll.u32 [#allocation8], 4
      %s60 = int_to_ptr.vmem [resolvable:$true] %s59
      %65 = dma.hbm_to_vmem [thread:$0]  %s5, 2048, %s60, [#allocation9], 128, 128, 8
    $region25: #{tpu_custom_call.1} parent=1 // pred_fallthru
      _
    // Predicated region
    $region26: #{tpu_custom_call.1} parent=1 // pred_check
      _
    $region27: #{tpu_custom_call.1} parent=1 // pred_check_branch
      %67 = sbr.rel (0) target = $region29
    $region28: #{tpu_custom_call.1} parent=1 // pred_region
      _
    $region29: #{tpu_custom_call.1} parent=1 // pred_fallthru
      _
    // Predicated region
    $region30: #{tpu_custom_call.1} parent=1 // pred_check
      _
    $region31: #{tpu_custom_call.1} parent=1 // pred_check_branch
      %69 = sbr.rel (0) target = $region33
    $region32: #{tpu_custom_call.1} parent=1 // pred_region
      %70 = dma.done [#allocation3], 128
    $region33: #{tpu_custom_call.1} parent=1 // pred_fallthru
      _
    // Predicated region
    $region34: #{tpu_custom_call.1} parent=1 // pred_check
      _
    $region35: #{tpu_custom_call.1} parent=1 // pred_check_branch
      %72 = sbr.rel (0) target = $region37
    $region36: #{tpu_custom_call.1} parent=1 // pred_region
      %73 = dma.done [#allocation6], 512
    $region37: #{tpu_custom_call.1} parent=1 // pred_fallthru
      _
    // Predicated region
    $region38: #{tpu_custom_call.1} parent=1 // pred_check
      _
    $region39: #{tpu_custom_call.1} parent=1 // pred_check_branch
      %75 = sbr.rel (0) target = $region41
    $region40: #{tpu_custom_call.1} parent=1 // pred_region
      %76 = dma.done [#allocation6], 2048
    $region41: #{tpu_custom_call.1} parent=1 // pred_fallthru
      _
    // Predicated region
    $region42: #{tpu_custom_call.1} parent=1 // pred_check
      _
    $region43: #{tpu_custom_call.1} parent=1 // pred_check_branch
      %78 = sbr.rel (0) target = $region45
    $region44: #{tpu_custom_call.1} parent=1 // pred_region
      %79 = dma.done [#allocation9], 2048
    $region45: #{tpu_custom_call.1} parent=1 // pred_fallthru
      _
    %v80 = vld [vmem:[#allocation2] sm:$0xff]
    %v81 = vld [vmem:[#allocation5] sm:$0xff]
    %v82 = vld [vmem:[#allocation5 + $0x8] sm:$0xff]
    %v83 = vld [vmem:[#allocation5 + $0x10] sm:$0xff]
    %v84 = vld [vmem:[#allocation5 + $0x18] sm:$0xff]
    %v85 = vld [vmem:[%s2] sm:$0x1]
    %v87 = vlaneseq
    %v88 = vshrl.u32 %v87, 7
    %v89 = vsub.s32 0, %v88
    %v90 = vrot.slane %v85, %v89
    %vm92 = vcmask 261120
    %v94 = vsel %vm92, %v80, 0
    %96 = vmatprep.subr.mxu0 0.0
    %97 = vmatpush1.msra.mxu0 0.0
    %98 = vmatprep.subr.mxu0 0.0
    %99 = vmatpush1.msra.mxu0 0.0
    %100 = vmatprep.subr.mxu0 0.0
    %101 = vmatpush1.msra.mxu0 0.0
    %102 = vmatprep.subr.mxu0 0.0
    %103 = vmatpush1.msra.mxu0 0.0
    %104 = vmatprep.subr.mxu0 0.0
    %105 = vmatpush1.msra.mxu0 0.0
    %106 = vmatprep.subr.mxu0 0.0
    %107 = vmatpush1.msra.mxu0 0.0
    %108 = vmatprep.subr.mxu0 0.0
    %109 = vmatpush1.msra.mxu0 0.0
    %110 = vmatprep.subr.mxu0 0.0
    %111 = vmatpush1.msra.mxu0 0.0
    %112 = vmatprep.subr.mxu0 0.0
    %113 = vmatpush1.msra.mxu0 0.0
    %114 = vmatprep.subr.mxu0 0.0
    %115 = vmatpush1.msra.mxu0 0.0
    %116 = vmatprep.subr.mxu0 0.0
    %117 = vmatpush1.msra.mxu0 0.0
    %118 = vmatprep.subr.mxu0 0.0
    %119 = vmatpush1.msra.mxu0 0.0
    %120 = vmatprep.subr.mxu0 0.0
    %121 = vmatpush1.msra.mxu0 %v84
    %122 = vmatprep.subr.mxu0 0.0
    %123 = vmatpush1.msra.mxu0 %v83
    %124 = vmatprep.subr.mxu0 0.0
    %125 = vmatpush1.msra.mxu0 %v82
    %126 = vmatprep.subr.mxu0 0.0
    %127 = vmatpush1.msra.mxu0 %v81
    %128 = vmatprep.subr.mxu0 0.0
    %129 = vmatpush2.msra.mxu0 0.0
    %130 = vmatprep.subr.mxu0 0.0
    %131 = vmatpush2.msra.mxu0 0.0
    %132 = vmatprep.subr.mxu0 0.0
    %133 = vmatpush2.msra.mxu0 0.0
    %134 = vmatprep.subr.mxu0 0.0
    %135 = vmatpush2.msra.mxu0 0.0
    %136 = vmatprep.subr.mxu0 0.0
    %137 = vmatpush2.msra.mxu0 0.0
    %138 = vmatprep.subr.mxu0 0.0
    %139 = vmatpush2.msra.mxu0 0.0
    %140 = vmatprep.subr.mxu0 0.0
    %141 = vmatpush2.msra.mxu0 0.0
    %142 = vmatprep.subr.mxu0 0.0
    %143 = vmatpush2.msra.mxu0 0.0
    %144 = vmatprep.subr.mxu0 0.0
    %145 = vmatpush2.msra.mxu0 0.0
    %146 = vmatprep.subr.mxu0 0.0
    %147 = vmatpush2.msra.mxu0 0.0
    %148 = vmatprep.subr.mxu0 0.0
    %149 = vmatpush2.msra.mxu0 0.0
    %150 = vmatprep.subr.mxu0 0.0
    %151 = vmatpush2.msra.mxu0 0.0
    %152 = vmatprep.subr.mxu0 0.0
    %153 = vmatpush2.msra.mxu0 0.0
    %154 = vmatprep.subr.mxu0 0.0
    %155 = vmatpush2.msra.mxu0 0.0
    %156 = vmatprep.subr.mxu0 0.0
    %157 = vmatpush2.msra.mxu0 0.0
    %158 = vmatprep.subr.mxu0 0.0
    %159 = vmatpush2.msra.mxu0 0.0
    %160 = vmatprep.mubr.f32.mxu0 0.0
    %161 = vmatmul.mubr.f32.gmra.mxu0 %v94
    %v162 = vpop.f32.mrf.mxu0
    %v163 = vadd.f32 %v90, %v162
    %v164 = vpop.f32.mrf.mxu0
    %165 = vdwg.mxu0
    %v166 = vtanh.pop %v163
    %v167 = vld [vmem:[#allocation7] sm:$0xff]
    %v168 = vld [vmem:[#allocation7 + $0x8] sm:$0xff]
    %v169 = vld [vmem:[#allocation7 + $0x10] sm:$0xff]
    %v170 = vld [vmem:[#allocation7 + $0x18] sm:$0xff]
    %v171 = vld [vmem:[#allocation7 + $0x20] sm:$0xff]
    %v172 = vld [vmem:[#allocation7 + $0x28] sm:$0xff]
    %v173 = vld [vmem:[#allocation7 + $0x30] sm:$0xff]
    %v174 = vld [vmem:[#allocation7 + $0x38] sm:$0xff]
    %v175 = vld [vmem:[#allocation7 + $0x40] sm:$0xff]
    %v176 = vld [vmem:[#allocation7 + $0x48] sm:$0xff]
    %v177 = vld [vmem:[#allocation7 + $0x50] sm:$0xff]
    %v178 = vld [vmem:[#allocation7 + $0x58] sm:$0xff]
    %v179 = vld [vmem:[#allocation7 + $0x60] sm:$0xff]
    %v180 = vld [vmem:[#allocation7 + $0x68] sm:$0xff]
    %v181 = vld [vmem:[#allocation7 + $0x70] sm:$0xff]
    %v182 = vld [vmem:[#allocation7 + $0x78] sm:$0xff]
    %v183 = vld [vmem:[%s4] sm:$0x1]
    %v185 = vlaneseq
    %v186 = vshrl.u32 %v185, 7
    %v187 = vsub.s32 0, %v186
    %v188 = vrot.slane %v183, %v187
    %190 = vmatprep.subr.mxu0 0.0
    %191 = vmatpush1.msra.mxu0 %v182
    %192 = vmatprep.subr.mxu0 0.0
    %193 = vmatpush1.msra.mxu0 %v181
    %194 = vmatprep.subr.mxu0 0.0
    %195 = vmatpush1.msra.mxu0 %v180
    %196 = vmatprep.subr.mxu0 0.0
    %197 = vmatpush1.msra.mxu0 %v179
    %198 = vmatprep.subr.mxu0 0.0
    %199 = vmatpush1.msra.mxu0 %v178
    %200 = vmatprep.subr.mxu0 0.0
    %201 = vmatpush1.msra.mxu0 %v177
    %202 = vmatprep.subr.mxu0 0.0
    %203 = vmatpush1.msra.mxu0 %v176
    %204 = vmatprep.subr.mxu0 0.0
    %205 = vmatpush1.msra.mxu0 %v175
    %206 = vmatprep.subr.mxu0 0.0
    %207 = vmatpush1.msra.mxu0 %v174
    %208 = vmatprep.subr.mxu0 0.0
    %209 = vmatpush1.msra.mxu0 %v173
    %210 = vmatprep.subr.mxu0 0.0
    %211 = vmatpush1.msra.mxu0 %v172
    %212 = vmatprep.subr.mxu0 0.0
    %213 = vmatpush1.msra.mxu0 %v171
    %214 = vmatprep.subr.mxu0 0.0
    %215 = vmatpush1.msra.mxu0 %v170
    %216 = vmatprep.subr.mxu0 0.0
    %217 = vmatpush1.msra.mxu0 %v169
    %218 = vmatprep.subr.mxu0 0.0
    %219 = vmatpush1.msra.mxu0 %v168
    %220 = vmatprep.subr.mxu0 0.0
    %221 = vmatpush1.msra.mxu0 %v167
    %222 = vmatprep.subr.mxu0 0.0
    %223 = vmatpush2.msra.mxu0 0.0
    %224 = vmatprep.subr.mxu0 0.0
    %225 = vmatpush2.msra.mxu0 0.0
    %226 = vmatprep.subr.mxu0 0.0
    %227 = vmatpush2.msra.mxu0 0.0
    %228 = vmatprep.subr.mxu0 0.0
    %229 = vmatpush2.msra.mxu0 0.0
    %230 = vmatprep.subr.mxu0 0.0
    %231 = vmatpush2.msra.mxu0 0.0
    %232 = vmatprep.subr.mxu0 0.0
    %233 = vmatpush2.msra.mxu0 0.0
    %234 = vmatprep.subr.mxu0 0.0
    %235 = vmatpush2.msra.mxu0 0.0
    %236 = vmatprep.subr.mxu0 0.0
    %237 = vmatpush2.msra.mxu0 0.0
    %238 = vmatprep.subr.mxu0 0.0
    %239 = vmatpush2.msra.mxu0 0.0
    %240 = vmatprep.subr.mxu0 0.0
    %241 = vmatpush2.msra.mxu0 0.0
    %242 = vmatprep.subr.mxu0 0.0
    %243 = vmatpush2.msra.mxu0 0.0
    %244 = vmatprep.subr.mxu0 0.0
    %245 = vmatpush2.msra.mxu0 0.0
    %246 = vmatprep.subr.mxu0 0.0
    %247 = vmatpush2.msra.mxu0 0.0
    %248 = vmatprep.subr.mxu0 0.0
    %249 = vmatpush2.msra.mxu0 0.0
    %250 = vmatprep.subr.mxu0 0.0
    %251 = vmatpush2.msra.mxu0 0.0
    %252 = vmatprep.subr.mxu0 0.0
    %253 = vmatpush2.msra.mxu0 0.0
    %254 = vmatprep.mubr.f32.mxu0 0.0
    %255 = vmatmul.mubr.f32.gmra.mxu0 %v166
    %v256 = vpop.f32.mrf.mxu0
    %v257 = vadd.f32 %v188, %v256
    %v258 = vpop.f32.mrf.mxu0
    %259 = vdwg.mxu0
    %v260 = vtanh.pop %v257
    %v261 = vld [vmem:[#allocation8] sm:$0xff]
    %v262 = vld [vmem:[#allocation8 + $0x8] sm:$0xff]
    %v263 = vld [vmem:[#allocation8 + $0x10] sm:$0xff]
    %v264 = vld [vmem:[#allocation8 + $0x18] sm:$0xff]
    %v265 = vld [vmem:[#allocation8 + $0x20] sm:$0xff]
    %v266 = vld [vmem:[#allocation8 + $0x28] sm:$0xff]
    %v267 = vld [vmem:[#allocation8 + $0x30] sm:$0xff]
    %v268 = vld [vmem:[#allocation8 + $0x38] sm:$0xff]
    %v269 = vld [vmem:[#allocation8 + $0x40] sm:$0xff]
    %v270 = vld [vmem:[#allocation8 + $0x48] sm:$0xff]
    %v271 = vld [vmem:[#allocation8 + $0x50] sm:$0xff]
    %v272 = vld [vmem:[#allocation8 + $0x58] sm:$0xff]
    %v273 = vld [vmem:[#allocation8 + $0x60] sm:$0xff]
    %v274 = vld [vmem:[#allocation8 + $0x68] sm:$0xff]
    %v275 = vld [vmem:[#allocation8 + $0x70] sm:$0xff]
    %v276 = vld [vmem:[#allocation8 + $0x78] sm:$0xff]
    %v277 = vld [vmem:[%s6] sm:$0x1]
    %v279 = vlaneseq
    %v280 = vshrl.u32 %v279, 7
    %v281 = vsub.s32 0, %v280
    %v282 = vrot.slane %v277, %v281
    %284 = vmatprep.subr.mxu0 0.0
    %285 = vmatpush1.msra.mxu0 %v276
    %286 = vmatprep.subr.mxu0 0.0
    %287 = vmatpush1.msra.mxu0 %v275
    %288 = vmatprep.subr.mxu0 0.0
    %289 = vmatpush1.msra.mxu0 %v274
    %290 = vmatprep.subr.mxu0 0.0
    %291 = vmatpush1.msra.mxu0 %v273
    %292 = vmatprep.subr.mxu0 0.0
    %293 = vmatpush1.msra.mxu0 %v272
    %294 = vmatprep.subr.mxu0 0.0
    %295 = vmatpush1.msra.mxu0 %v271
    %296 = vmatprep.subr.mxu0 0.0
    %297 = vmatpush1.msra.mxu0 %v270
    %298 = vmatprep.subr.mxu0 0.0
    %299 = vmatpush1.msra.mxu0 %v269
    %300 = vmatprep.subr.mxu0 0.0
    %301 = vmatpush1.msra.mxu0 %v268
    %302 = vmatprep.subr.mxu0 0.0
    %303 = vmatpush1.msra.mxu0 %v267
    %304 = vmatprep.subr.mxu0 0.0
    %305 = vmatpush1.msra.mxu0 %v266
    %306 = vmatprep.subr.mxu0 0.0
    %307 = vmatpush1.msra.mxu0 %v265
    %308 = vmatprep.subr.mxu0 0.0
    %309 = vmatpush1.msra.mxu0 %v264
    %310 = vmatprep.subr.mxu0 0.0
    %311 = vmatpush1.msra.mxu0 %v263
    %312 = vmatprep.subr.mxu0 0.0
    %313 = vmatpush1.msra.mxu0 %v262
    %314 = vmatprep.subr.mxu0 0.0
    %315 = vmatpush1.msra.mxu0 %v261
    %316 = vmatprep.subr.mxu0 0.0
    %317 = vmatpush2.msra.mxu0 0.0
    %318 = vmatprep.subr.mxu0 0.0
    %319 = vmatpush2.msra.mxu0 0.0
    %320 = vmatprep.subr.mxu0 0.0
    %321 = vmatpush2.msra.mxu0 0.0
    %322 = vmatprep.subr.mxu0 0.0
    %323 = vmatpush2.msra.mxu0 0.0
    %324 = vmatprep.subr.mxu0 0.0
    %325 = vmatpush2.msra.mxu0 0.0
    %326 = vmatprep.subr.mxu0 0.0
    %327 = vmatpush2.msra.mxu0 0.0
    %328 = vmatprep.subr.mxu0 0.0
    %329 = vmatpush2.msra.mxu0 0.0
    %330 = vmatprep.subr.mxu0 0.0
    %331 = vmatpush2.msra.mxu0 0.0
    %332 = vmatprep.subr.mxu0 0.0
    %333 = vmatpush2.msra.mxu0 0.0
    %334 = vmatprep.subr.mxu0 0.0
    %335 = vmatpush2.msra.mxu0 0.0
    %336 = vmatprep.subr.mxu0 0.0
    %337 = vmatpush2.msra.mxu0 0.0
    %338 = vmatprep.subr.mxu0 0.0
    %339 = vmatpush2.msra.mxu0 0.0
    %340 = vmatprep.subr.mxu0 0.0
    %341 = vmatpush2.msra.mxu0 0.0
    %342 = vmatprep.subr.mxu0 0.0
    %343 = vmatpush2.msra.mxu0 0.0
    %344 = vmatprep.subr.mxu0 0.0
    %345 = vmatpush2.msra.mxu0 0.0
    %346 = vmatprep.subr.mxu0 0.0
    %347 = vmatpush2.msra.mxu0 0.0
    %348 = vmatprep.mubr.f32.mxu0 0.0
    %349 = vmatmul.mubr.f32.gmra.mxu0 %v260
    %v350 = vpop.f32.mrf.mxu0
    %v351 = vadd.f32 %v282, %v350
    %v352 = vpop.f32.mrf.mxu0
    %353 = vdwg.mxu0
    %354 = vst [vmem:[#allocation10] sm:$0xff] %v351
    // Predicated region
    $region46: #{tpu_custom_call.1} parent=1 // pred_check
      _
    $region47: #{tpu_custom_call.1} parent=1 // pred_check_branch
      %356 = sbr.rel (0) target = $region49
    $region48: #{tpu_custom_call.1} parent=1 // pred_region
      %s358 = ssub.s32 128, 128
      %359 = vsyncadd [#allocation4], %s358
      %s361 = sshll.u32 [#allocation10], 4
      %s362 = int_to_ptr.vmem [resolvable:$true] %s361
      %364 = dma.vmem_to_hbm [thread:$0]  %s362, 128, %s7, [#allocation4]
    $region49: #{tpu_custom_call.1} parent=1 // pred_fallthru
      _
    // Predicated region
    $region50: #{tpu_custom_call.1} parent=1 // pred_check
      _
    $region51: #{tpu_custom_call.1} parent=1 // pred_check_branch
      %366 = sbr.rel (0) target = $region53
    $region52: #{tpu_custom_call.1} parent=1 // pred_region
      %367 = dma.done [#allocation4], 128
    $region53: #{tpu_custom_call.1} parent=1 // pred_fallthru
      _
    %368 = vsyncpa [#allocation3], 1
    %369 = vsyncpa [#allocation6], 1
    %370 = vsyncpa [#allocation9], 1
    %371 = vsyncpa [#allocation4], 1

</llo_original>
